<compile_context>
chip_gen: v7x
topology: tpu7x:2x2x1
jax: 0.10.0
libtpu: 0.0.40
codegen_flags: <defaults>
</compile_context>

<pallas_src>
import jax
import jax.numpy as jnp
from jax.experimental import pallas as pl
from jax.experimental.pallas import tpu as pltpu

LANE = 128
_MAX_TILE_B = 4096  # ~11 MiB of per-tile VMEM at these 128-wide layer sizes.


def _round_up(n, m):
    return ((n + m - 1) // m) * m


def _num_tensorcores_per_chip():
    """v7x has 2 TensorCores per chip; v5e/v6e have 1."""
    try:
        kind = jax.devices()[0].device_kind.lower()
    except Exception:
        return 1
    return 2 if "v7" in kind else 1


def _vmem_limit_bytes(tile_b, in_features, out_pad, params):
    """Derive the VMEM cap from actual buffer sizes (with 2x headroom)."""
    weight_bytes = sum(int(a.size) * a.dtype.itemsize for a in params.values())
    x_tile = tile_b * in_features * 4        # f32 input tile
    out_tile = tile_b * out_pad * 4          # f32 output tile
    inter = 3 * tile_b * LANE * 4            # f32 intermediates inside the body
    need = 2 * (x_tile + out_tile) + weight_bytes + inter
    # Generous 2x margin for compiler scratch, but stay well under v7x's 64 MiB.
    return int(min(max(2 * need, 8 * 1024 * 1024), 32 * 1024 * 1024))


def mlp_kernel(x_ref, w1_ref, b1_ref, w2_ref, b2_ref, w3_ref, b3_ref,
               w4_ref, b4_ref, o_ref):
    # bf16 MXU inputs + f32 accumulation; bias-add / ReLU stay in f32 (VPU).
    x = x_ref[...].astype(jnp.bfloat16)               # in-kernel cast (free)
    # fc1 + ReLU  (dropout1 = identity at inference)
    h = jnp.dot(x, w1_ref[...], preferred_element_type=jnp.float32)
    h = jnp.maximum(h + b1_ref[...], 0.0)
    # fc2 + ReLU  (dropout2 = identity at inference)
    h = jnp.dot(h.astype(jnp.bfloat16), w2_ref[...],
                preferred_element_type=jnp.float32)
    h = jnp.maximum(h + b2_ref[...], 0.0)
    # fc3 + ReLU  (dropout3 = identity at inference)
    h = jnp.dot(h.astype(jnp.bfloat16), w3_ref[...],
                preferred_element_type=jnp.float32)
    h = jnp.maximum(h + b3_ref[...], 0.0)
    # fc4 (logits, no activation); output block is lane-dense (128-wide).
    h = jnp.dot(h.astype(jnp.bfloat16), w4_ref[...],
                preferred_element_type=jnp.float32)
    o_ref[...] = (h + b4_ref[...]).astype(o_ref.dtype)


def complex_nn2_forward(x, params, dims, *, tile_b=None):
    """x: (B, input_size) float32 (unpadded).  Returns (B, num_classes) f32 logits."""
    B, in_features = x.shape
    assert in_features == params["w1"].shape[0]
    out_pad = params["w4"].shape[1]

    if tile_b is None:
        # One grid step per TensorCore: single big tile on v5e/v6e (grid is a
        # serial loop there), two equal halves on v7x (2 TCs share "parallel").
        tile_b = _round_up(pl.cdiv(B, _num_tensorcores_per_chip()), 8)
    # Multiple of 8, not (much) beyond B, under the VMEM-safe cap.  For tiny
    # B (<8) this still yields tile_b=8: rows are independent and padded rows
    # are never written back, so the partial block is safe.
    tile_b = max(8, min(tile_b, _round_up(B, 8), _MAX_TILE_B))
    grid = (pl.cdiv(B, tile_b),)

    # Weights/biases: constant index_map (resident), single-buffered.
    resident = lambda arr: pl.BlockSpec(arr.shape, lambda i: (0, 0),
                                        pipeline_mode=pl.Buffered(1))

    out_padded = pl.pallas_call(
        mlp_kernel,
        out_shape=jax.ShapeDtypeStruct((B, out_pad), jnp.float32),
        grid_spec=pltpu.PrefetchScalarGridSpec(
            num_scalar_prefetch=0,
            grid=grid,
            in_specs=[
                # x tile: last dim equals the full array dim -> (8,128) rule ok.
                pl.BlockSpec((tile_b, in_features), lambda i: (i, 0)),
                resident(params["w1"]), resident(params["b1"]),
                resident(params["w2"]), resident(params["b2"]),
                resident(params["w3"]), resident(params["b3"]),
                resident(params["w4"]), resident(params["b4"]),
            ],
            out_specs=pl.BlockSpec((tile_b, out_pad), lambda i: (i, 0)),
        ),
        compiler_params=pltpu.CompilerParams(
            dimension_semantics=("parallel",),
            vmem_limit_bytes=_vmem_limit_bytes(tile_b, in_features, out_pad,
                                               params),
        ),
    )(x, params["w1"], params["b1"], params["w2"], params["b2"],
      params["w3"], params["b3"], params["w4"], params["b4"])

    # Lane-dense kernel output; slice back to the real class count (fuses with
    # the surrounding computation when the wrapper runs under jit).
    return out_padded[:, :dims["num_classes"]]


def init_params(key, input_size, num1, num2, num3, num_classes):
    """Kaiming-uniform-ish init matching nn.Linear shapes.

    PyTorch nn.Linear stores weight as (out, in); we store the transpose
    (in, out).  Output/hidden feature dims are zero-padded to multiples of 128
    (lane-dense); fc1 keeps its real fan_in so x needs no wrapper-side padding.
    Weights in bf16 (MXU inputs), biases in f32 (VPU adds).  Zero padding
    leaves the math unchanged: padded hidden units are ReLU(0)=0 and padded
    weight rows/cols are zero.
    """
    ks = jax.random.split(key, 8)

    def linear(kw, kb, fan_in, fan_out, pad_in=True):
        bound = 1.0 / jnp.sqrt(fan_in)
        w = jax.random.uniform(kw, (fan_in, fan_out), jnp.float32, -bound, bound)
        b = jax.random.uniform(kb, (1, fan_out), jnp.float32, -bound, bound)
        pi = _round_up(fan_in, LANE) if pad_in else fan_in
        po = _round_up(fan_out, LANE)
        w = jnp.pad(w, ((0, pi - fan_in), (0, po - fan_out))).astype(jnp.bfloat16)
        b = jnp.pad(b, ((0, 0), (0, po - fan_out)))
        return w, b

    w1, b1 = linear(ks[0], ks[1], input_size, num1, pad_in=False)
    w2, b2 = linear(ks[2], ks[3], num1, num2)
    w3, b3 = linear(ks[4], ks[5], num2, num3)
    w4, b4 = linear(ks[6], ks[7], num3, num_classes)
    params = {"w1": w1, "b1": b1, "w2": w2, "b2": b2,
              "w3": w3, "b3": b3, "w4": w4, "b4": b4}
    dims = {"input_size": input_size, "num_classes": num_classes}
    return params, dims


def reference_forward(x, p, dims):
    """Pure-JAX reference with identical bf16-input / f32-accumulate math."""
    h = jnp.maximum(jnp.dot(x.astype(jnp.bfloat16), p["w1"],
                            preferred_element_type=jnp.float32) + p["b1"], 0.0)
    h = jnp.maximum(jnp.dot(h.astype(jnp.bfloat16), p["w2"],
                            preferred_element_type=jnp.float32) + p["b2"], 0.0)
    h = jnp.maximum(jnp.dot(h.astype(jnp.bfloat16), p["w3"],
                            preferred_element_type=jnp.float32) + p["b3"], 0.0)
    out = jnp.dot(h.astype(jnp.bfloat16), p["w4"],
                  preferred_element_type=jnp.float32) + p["b4"]
    return out[:, :dims["num_classes"]]


if __name__ == "__main__":
    # Shapes consistent with the module: input_size=32, num1=64, num2=48,
    # num3=32, num_classes=8.  Batch 256: one tile on v5e/v6e, two parallel
    # tiles on v7x (auto-selected from the device kind).
    B, INPUT_SIZE, NUM1, NUM2, NUM3, NUM_CLASSES = 256, 32, 64, 48, 32, 8

    key = jax.random.PRNGKey(0)
    kx, kp = jax.random.split(key)
    x = jax.random.normal(kx, (B, INPUT_SIZE), dtype=jnp.float32)
    params, dims = init_params(kp, INPUT_SIZE, NUM1, NUM2, NUM3, NUM_CLASSES)

    # jit so the kernel launch and the num_classes slice live in one executable
    # (no separate host-visible pass re-reading the padded output).
    fwd = jax.jit(lambda xb: complex_nn2_forward(xb, params, dims))
    out = jax.block_until_ready(fwd(x))

    ref = reference_forward(x, params, dims)
    assert out.shape == (B, NUM_CLASSES)
    assert jnp.allclose(out, ref, atol=1e-3, rtol=1e-3), (
        float(jnp.max(jnp.abs(out - ref))))

    print("KERNEL_OK")
</pallas_src>

<mosaic_0001>
module attributes {stable_mosaic.version = 11 : i64} {
  func.func @mlp_kernel(%arg0: i32, %arg1: memref<256x32xf32, #tpu.memory_space<vmem>>, %arg2: memref<32x128xbf16, #tpu.memory_space<vmem>>, %arg3: memref<1x128xf32, #tpu.memory_space<vmem>>, %arg4: memref<128x128xbf16, #tpu.memory_space<vmem>>, %arg5: memref<1x128xf32, #tpu.memory_space<vmem>>, %arg6: memref<128x128xbf16, #tpu.memory_space<vmem>>, %arg7: memref<1x128xf32, #tpu.memory_space<vmem>>, %arg8: memref<128x128xbf16, #tpu.memory_space<vmem>>, %arg9: memref<1x128xf32, #tpu.memory_space<vmem>>, %arg10: memref<256x128xf32, #tpu.memory_space<vmem>>) attributes {dimension_semantics = [#tpu.dimension_semantics<parallel>], iteration_bounds = array<i64: 1>, scalar_prefetch = 0 : i64, scratch_operands = 0 : i64, tpu.core_type = #tpu.core_type<tc>, window_params = [{transform_indices = @transform_0, window_bounds = array<i64: 256, 32>}, {pipeline_mode = #tpu.pipeline_mode<synchronous>, transform_indices = @transform_1, window_bounds = array<i64: 32, 128>}, {pipeline_mode = #tpu.pipeline_mode<synchronous>, transform_indices = @transform_2, window_bounds = array<i64: 1, 128>}, {pipeline_mode = #tpu.pipeline_mode<synchronous>, transform_indices = @transform_3, window_bounds = array<i64: 128, 128>}, {pipeline_mode = #tpu.pipeline_mode<synchronous>, transform_indices = @transform_4, window_bounds = array<i64: 1, 128>}, {pipeline_mode = #tpu.pipeline_mode<synchronous>, transform_indices = @transform_5, window_bounds = array<i64: 128, 128>}, {pipeline_mode = #tpu.pipeline_mode<synchronous>, transform_indices = @transform_6, window_bounds = array<i64: 1, 128>}, {pipeline_mode = #tpu.pipeline_mode<synchronous>, transform_indices = @transform_7, window_bounds = array<i64: 128, 128>}, {pipeline_mode = #tpu.pipeline_mode<synchronous>, transform_indices = @transform_8, window_bounds = array<i64: 1, 128>}, {transform_indices = @transform_9, window_bounds = array<i64: 256, 128>}]} {
    %c0 = arith.constant 0 : index
    %c0_0 = arith.constant 0 : index
    %0 = vector.load %arg1[%c0, %c0_0] : memref<256x32xf32, #tpu.memory_space<vmem>>, vector<256x32xf32>
    %1 = arith.truncf %0 : vector<256x32xf32> to vector<256x32xbf16>
    %c0_1 = arith.constant 0 : index
    %c0_2 = arith.constant 0 : index
    %2 = vector.load %arg2[%c0_1, %c0_2] : memref<32x128xbf16, #tpu.memory_space<vmem>>, vector<32x128xbf16>
    %cst = arith.constant dense<0.000000e+00> : vector<256x128xf32>
    %3 = tpu.matmul %1, %2, %cst {dimension_numbers = #tpu.dot_dimension_numbers<[1], [0], [0], [1], [0, 0, 1, 1], [], []>} : vector<256x32xbf16>, vector<32x128xbf16>, vector<256x128xf32> -> vector<256x128xf32>
    %c0_3 = arith.constant 0 : index
    %c0_4 = arith.constant 0 : index
    %4 = vector.load %arg3[%c0_3, %c0_4] : memref<1x128xf32, #tpu.memory_space<vmem>>, vector<1x128xf32>
    %5 = vector.broadcast %4 : vector<1x128xf32> to vector<256x128xf32>
    %6 = arith.addf %3, %5 : vector<256x128xf32>
    %cst_5 = arith.constant 0.000000e+00 : f32
    %7 = vector.broadcast %cst_5 : f32 to vector<256x128xf32>
    %8 = arith.maximumf %6, %7 : vector<256x128xf32>
    %9 = arith.truncf %8 : vector<256x128xf32> to vector<256x128xbf16>
    %c0_6 = arith.constant 0 : index
    %c0_7 = arith.constant 0 : index
    %10 = vector.load %arg4[%c0_6, %c0_7] : memref<128x128xbf16, #tpu.memory_space<vmem>>, vector<128x128xbf16>
    %cst_8 = arith.constant dense<0.000000e+00> : vector<256x128xf32>
    %11 = tpu.matmul %9, %10, %cst_8 {dimension_numbers = #tpu.dot_dimension_numbers<[1], [0], [0], [1], [0, 0, 1, 1], [], []>} : vector<256x128xbf16>, vector<128x128xbf16>, vector<256x128xf32> -> vector<256x128xf32>
    %c0_9 = arith.constant 0 : index
    %c0_10 = arith.constant 0 : index
    %12 = vector.load %arg5[%c0_9, %c0_10] : memref<1x128xf32, #tpu.memory_space<vmem>>, vector<1x128xf32>
    %13 = vector.broadcast %12 : vector<1x128xf32> to vector<256x128xf32>
    %14 = arith.addf %11, %13 : vector<256x128xf32>
    %cst_11 = arith.constant 0.000000e+00 : f32
    %15 = vector.broadcast %cst_11 : f32 to vector<256x128xf32>
    %16 = arith.maximumf %14, %15 : vector<256x128xf32>
    %17 = arith.truncf %16 : vector<256x128xf32> to vector<256x128xbf16>
    %c0_12 = arith.constant 0 : index
    %c0_13 = arith.constant 0 : index
    %18 = vector.load %arg6[%c0_12, %c0_13] : memref<128x128xbf16, #tpu.memory_space<vmem>>, vector<128x128xbf16>
    %cst_14 = arith.constant dense<0.000000e+00> : vector<256x128xf32>
    %19 = tpu.matmul %17, %18, %cst_14 {dimension_numbers = #tpu.dot_dimension_numbers<[1], [0], [0], [1], [0, 0, 1, 1], [], []>} : vector<256x128xbf16>, vector<128x128xbf16>, vector<256x128xf32> -> vector<256x128xf32>
    %c0_15 = arith.constant 0 : index
    %c0_16 = arith.constant 0 : index
    %20 = vector.load %arg7[%c0_15, %c0_16] : memref<1x128xf32, #tpu.memory_space<vmem>>, vector<1x128xf32>
    %21 = vector.broadcast %20 : vector<1x128xf32> to vector<256x128xf32>
    %22 = arith.addf %19, %21 : vector<256x128xf32>
    %cst_17 = arith.constant 0.000000e+00 : f32
    %23 = vector.broadcast %cst_17 : f32 to vector<256x128xf32>
    %24 = arith.maximumf %22, %23 : vector<256x128xf32>
    %25 = arith.truncf %24 : vector<256x128xf32> to vector<256x128xbf16>
    %c0_18 = arith.constant 0 : index
    %c0_19 = arith.constant 0 : index
    %26 = vector.load %arg8[%c0_18, %c0_19] : memref<128x128xbf16, #tpu.memory_space<vmem>>, vector<128x128xbf16>
    %cst_20 = arith.constant dense<0.000000e+00> : vector<256x128xf32>
    %27 = tpu.matmul %25, %26, %cst_20 {dimension_numbers = #tpu.dot_dimension_numbers<[1], [0], [0], [1], [0, 0, 1, 1], [], []>} : vector<256x128xbf16>, vector<128x128xbf16>, vector<256x128xf32> -> vector<256x128xf32>
    %c0_21 = arith.constant 0 : index
    %c0_22 = arith.constant 0 : index
    %28 = vector.load %arg9[%c0_21, %c0_22] : memref<1x128xf32, #tpu.memory_space<vmem>>, vector<1x128xf32>
    %29 = vector.broadcast %28 : vector<1x128xf32> to vector<256x128xf32>
    %30 = arith.addf %27, %29 : vector<256x128xf32>
    %c0_23 = arith.constant 0 : index
    %c0_24 = arith.constant 0 : index
    %31 = vector.load %arg10[%c0_23, %c0_24] : memref<256x128xf32, #tpu.memory_space<vmem>>, vector<256x128xf32>
    tpu.vector_store %arg10[%c0_23, %c0_24], %30 {strides = array<i32>} : memref<256x128xf32, #tpu.memory_space<vmem>>, vector<256x128xf32>,
    return
  }
  func.func @transform_0(%arg0: i32) -> (i32, i32) {
    %c0_i32 = arith.constant 0 : i32
    %c0_i32_0 = arith.constant 0 : i32
    return %arg0, %c0_i32 : i32, i32
  }
  func.func @transform_1(%arg0: i32) -> (i32, i32) {
    %c0_i32 = arith.constant 0 : i32
    %c0_i32_0 = arith.constant 0 : i32
    %c0_i32_1 = arith.constant 0 : i32
    return %c0_i32, %c0_i32_0 : i32, i32
  }
  func.func @transform_2(%arg0: i32) -> (i32, i32) {
    %c0_i32 = arith.constant 0 : i32
    %c0_i32_0 = arith.constant 0 : i32
    %c0_i32_1 = arith.constant 0 : i32
    return %c0_i32, %c0_i32_0 : i32, i32
  }
  func.func @transform_3(%arg0: i32) -> (i32, i32) {
    %c0_i32 = arith.constant 0 : i32
    %c0_i32_0 = arith.constant 0 : i32
    %c0_i32_1 = arith.constant 0 : i32
    return %c0_i32, %c0_i32_0 : i32, i32
  }
  func.func @transform_4(%arg0: i32) -> (i32, i32) {
    %c0_i32 = arith.constant 0 : i32
    %c0_i32_0 = arith.constant 0 : i32
    %c0_i32_1 = arith.constant 0 : i32
    return %c0_i32, %c0_i32_0 : i32, i32
  }
  func.func @transform_5(%arg0: i32) -> (i32, i32) {
    %c0_i32 = arith.constant 0 : i32
    %c0_i32_0 = arith.constant 0 : i32
    %c0_i32_1 = arith.constant 0 : i32
    return %c0_i32, %c0_i32_0 : i32, i32
  }
  func.func @transform_6(%arg0: i32) -> (i32, i32) {
    %c0_i32 = arith.constant 0 : i32
    %c0_i32_0 = arith.constant 0 : i32
    %c0_i32_1 = arith.constant 0 : i32
    return %c0_i32, %c0_i32_0 : i32, i32
  }
  func.func @transform_7(%arg0: i32) -> (i32, i32) {
    %c0_i32 = arith.constant 0 : i32
    %c0_i32_0 = arith.constant 0 : i32
    %c0_i32_1 = arith.constant 0 : i32
    return %c0_i32, %c0_i32_0 : i32, i32
  }
  func.func @transform_8(%arg0: i32) -> (i32, i32) {
    %c0_i32 = arith.constant 0 : i32
    %c0_i32_0 = arith.constant 0 : i32
    %c0_i32_1 = arith.constant 0 : i32
    return %c0_i32, %c0_i32_0 : i32, i32
  }
  func.func @transform_9(%arg0: i32) -> (i32, i32) {
    %c0_i32 = arith.constant 0 : i32
    %c0_i32_0 = arith.constant 0 : i32
    return %arg0, %c0_i32 : i32, i32
  }
}

</mosaic_0001>

<llo_original>
// kernel: _lambda_.1
$region0: #{_lambda_.1}
  #allocation0 [shape = 'u32[]', space=smem, size = 0x4, offset = 0x4, fixed_abs, tag = 'smem constant byte address 0x4 - core index']
  #allocation1 [shape = 'u32[144,128]{1,0:T(1,128)}', space=vmem, size = 0x12000, scoped, tag = 'internal scratch']
  %s0 = inlined_call_operand.vmem [shape: f32[256,32], index: 0, kind: input, shape index: {}]
  %s1 = inlined_call_operand.vmem [shape: bf16[32,128], index: 1, kind: input, shape index: {}]
  %s2 = inlined_call_operand.vmem [shape: f32[1,128], index: 2, kind: input, shape index: {}]
  %s3 = inlined_call_operand.vmem [shape: bf16[128,128], index: 3, kind: input, shape index: {}]
  %s4 = inlined_call_operand.vmem [shape: f32[1,128], index: 4, kind: input, shape index: {}]
  %s5 = inlined_call_operand.vmem [shape: bf16[128,128], index: 5, kind: input, shape index: {}]
  %s6 = inlined_call_operand.vmem [shape: f32[1,128], index: 6, kind: input, shape index: {}]
  %s7 = inlined_call_operand.vmem [shape: bf16[128,128], index: 7, kind: input, shape index: {}]
  %s8 = inlined_call_operand.vmem [shape: f32[1,128], index: 8, kind: input, shape index: {}]
  %s9 = inlined_call_operand.vmem [shape: f32[256,128], index: 9, kind: output, shape index: {}]
  %s10 = sld [smem:[#allocation0]]
  $region46: #{_lambda_.1} parent=0
    _
  %s12 = ssub.s32 1, %s10
  %s13 = scalar_select 0, %s12, %s10
  // Predicated region
  $region2: #{_lambda_.1} parent=0 // pred_check
    _
  $region3: #{_lambda_.1} parent=0 // pred_check_branch
    %15 = sbr.rel (0) target = $region5
  $region4: #{_lambda_.1} parent=0 // pred_region
    _
  $region5: #{_lambda_.1} parent=0 // pred_fallthru
    _
  // Predicated region
  $region6: #{_lambda_.1} parent=0 // pred_check
    _
  $region7: #{_lambda_.1} parent=0 // pred_check_branch
    %17 = sbr.rel (0) target = $region9
  $region8: #{_lambda_.1} parent=0 // pred_region
    _
  $region9: #{_lambda_.1} parent=0 // pred_fallthru
    _
  // Predicated region
  $region10: #{_lambda_.1} parent=0 // pred_check
    _
  $region11: #{_lambda_.1} parent=0 // pred_check_branch
    %19 = sbr.rel (0) target = $region13
  $region12: #{_lambda_.1} parent=0 // pred_region
    _
  $region13: #{_lambda_.1} parent=0 // pred_fallthru
    _
  // Predicated region
  $region14: #{_lambda_.1} parent=0 // pred_check
    _
  $region15: #{_lambda_.1} parent=0 // pred_check_branch
    %21 = sbr.rel (0) target = $region17
  $region16: #{_lambda_.1} parent=0 // pred_region
    _
  $region17: #{_lambda_.1} parent=0 // pred_fallthru
    _
  // Predicated region
  $region18: #{_lambda_.1} parent=0 // pred_check
    _
  $region19: #{_lambda_.1} parent=0 // pred_check_branch
    %23 = sbr.rel (0) target = $region21
  $region20: #{_lambda_.1} parent=0 // pred_region
    _
  $region21: #{_lambda_.1} parent=0 // pred_fallthru
    _
  // Predicated region
  $region22: #{_lambda_.1} parent=0 // pred_check
    _
  $region23: #{_lambda_.1} parent=0 // pred_check_branch
    %25 = sbr.rel (0) target = $region25
  $region24: #{_lambda_.1} parent=0 // pred_region
    _
  $region25: #{_lambda_.1} parent=0 // pred_fallthru
    _
  // Predicated region
  $region26: #{_lambda_.1} parent=0 // pred_check
    _
  $region27: #{_lambda_.1} parent=0 // pred_check_branch
    %27 = sbr.rel (0) target = $region29
  $region28: #{_lambda_.1} parent=0 // pred_region
    _
  $region29: #{_lambda_.1} parent=0 // pred_fallthru
    _
  // Predicated region
  $region30: #{_lambda_.1} parent=0 // pred_check
    _
  $region31: #{_lambda_.1} parent=0 // pred_check_branch
    %29 = sbr.rel (0) target = $region33
  $region32: #{_lambda_.1} parent=0 // pred_region
    _
  $region33: #{_lambda_.1} parent=0 // pred_fallthru
    _
  // Predicated region
  $region34: #{_lambda_.1} parent=0 // pred_check
    _
  $region35: #{_lambda_.1} parent=0 // pred_check_branch
    %31 = sbr.rel (0) target = $region37
  $region36: #{_lambda_.1} parent=0 // pred_region
    _
  $region37: #{_lambda_.1} parent=0 // pred_fallthru
    _
  %v33 = vld [vmem:[%s0] sm:$0xff]
  %v34 = vld [vmem:[%s0 + $0x8] sm:$0xff]
  %v35 = vld [vmem:[%s0 + $0x10] sm:$0xff]
  %v36 = vld [vmem:[%s0 + $0x18] sm:$0xff]
  %v37 = vld [vmem:[%s0 + $0x20] sm:$0xff]
  %v38 = vld [vmem:[%s0 + $0x28] sm:$0xff]
  %v39 = vld [vmem:[%s0 + $0x30] sm:$0xff]
  %v40 = vld [vmem:[%s0 + $0x38] sm:$0xff]
  %v41 = vld [vmem:[%s0 + $0x40] sm:$0xff]
  %v42 = vld [vmem:[%s0 + $0x48] sm:$0xff]
  %v43 = vld [vmem:[%s0 + $0x50] sm:$0xff]
  %v44 = vld [vmem:[%s0 + $0x58] sm:$0xff]
  %v45 = vld [vmem:[%s0 + $0x60] sm:$0xff]
  %v46 = vld [vmem:[%s0 + $0x68] sm:$0xff]
  %v47 = vld [vmem:[%s0 + $0x70] sm:$0xff]
  %v48 = vld [vmem:[%s0 + $0x78] sm:$0xff]
  %v49 = vld [vmem:[%s0 + $0x80] sm:$0xff]
  %v50 = vld [vmem:[%s0 + $0x88] sm:$0xff]
  %v51 = vld [vmem:[%s0 + $0x90] sm:$0xff]
  %v52 = vld [vmem:[%s0 + $0x98] sm:$0xff]
  %v53 = vld [vmem:[%s0 + $0xa0] sm:$0xff]
  %v54 = vld [vmem:[%s0 + $0xa8] sm:$0xff]
  %v55 = vld [vmem:[%s0 + $0xb0] sm:$0xff]
  %v56 = vld [vmem:[%s0 + $0xb8] sm:$0xff]
  %v57 = vld [vmem:[%s0 + $0xc0] sm:$0xff]
  %v58 = vld [vmem:[%s0 + $0xc8] sm:$0xff]
  %v59 = vld [vmem:[%s0 + $0xd0] sm:$0xff]
  %v60 = vld [vmem:[%s0 + $0xd8] sm:$0xff]
  %v61 = vld [vmem:[%s0 + $0xe0] sm:$0xff]
  %v62 = vld [vmem:[%s0 + $0xe8] sm:$0xff]
  %v63 = vld [vmem:[%s0 + $0xf0] sm:$0xff]
  %v64 = vld [vmem:[%s0 + $0xf8] sm:$0xff]
  %v65 = vpack.c.bf16 %v34, %v33
  %v66 = vpack.c.bf16 %v36, %v35
  %v67 = vpack.c.bf16 %v38, %v37
  %v68 = vpack.c.bf16 %v40, %v39
  %v69 = vpack.c.bf16 %v42, %v41
  %v70 = vpack.c.bf16 %v44, %v43
  %v71 = vpack.c.bf16 %v46, %v45
  %v72 = vpack.c.bf16 %v48, %v47
  %v73 = vpack.c.bf16 %v50, %v49
  %v74 = vpack.c.bf16 %v52, %v51
  %v75 = vpack.c.bf16 %v54, %v53
  %v76 = vpack.c.bf16 %v56, %v55
  %v77 = vpack.c.bf16 %v58, %v57
  %v78 = vpack.c.bf16 %v60, %v59
  %v79 = vpack.c.bf16 %v62, %v61
  %v80 = vpack.c.bf16 %v64, %v63
  %v81 = vld [vmem:[%s1] sm:$0xf]
  %v82 = vld [vmem:[%s1 + $0x4] sm:$0xf]
  %v83 = vld [vmem:[%s1 + $0x8] sm:$0xf]
  %v84 = vld [vmem:[%s1 + $0xc] sm:$0xf]
  %v85 = vld [vmem:[%s2] sm:$0x1]
  %v87 = vlaneseq
  %v88 = vshrl.u32 %v87, 7
  %v89 = vsub.s32 0, %v88
  %v90 = vrot.slane %v85, %v89
  %v96 = vunpack.c.l.b16 %v81
  %v97 = vunpack.c.l.b16 %v82
  %v98 = vunpack.c.l.b16 %v83
  %v99 = vunpack.c.l.b16 %v84
  %v100 = vpack.c.b16 %v97, %v96
  %v101 = vpack.c.b16 %v99, %v98
  %vm104 = vcmask 261120
  %v106 = vsel %vm104, %v65, 0
  %v109 = vsel %vm104, %v66, 0
  %v112 = vsel %vm104, %v67, 0
  %v115 = vsel %vm104, %v68, 0
  %v118 = vsel %vm104, %v69, 0
  %v121 = vsel %vm104, %v70, 0
  %v124 = vsel %vm104, %v71, 0
  %v127 = vsel %vm104, %v72, 0
  %v130 = vsel %vm104, %v73, 0
  %v133 = vsel %vm104, %v74, 0
  %v136 = vsel %vm104, %v75, 0
  %v139 = vsel %vm104, %v76, 0
  %v142 = vsel %vm104, %v77, 0
  %v145 = vsel %vm104, %v78, 0
  %v148 = vsel %vm104, %v79, 0
  %v151 = vsel %vm104, %v80, 0
  %153 = vmatprep.subr.bf16.mxu0 0
  %154 = vmatpush1.bf16.msra.mxu0 %v100
  %155 = vmatprep.subr.bf16.mxu0 0
  %156 = vmatpush1.bf16.msra.mxu0 %v101
  %157 = vmatprep.subr.bf16.mxu0 0
  %158 = vmatpush1.bf16.msra.mxu0 0
  %159 = vmatprep.subr.bf16.mxu0 0
  %160 = vmatpush1.bf16.msra.mxu0 0
  %161 = vmatprep.subr.bf16.mxu0 0
  %162 = vmatpush1.bf16.msra.mxu0 0
  %163 = vmatprep.subr.bf16.mxu0 0
  %164 = vmatpush1.bf16.msra.mxu0 0
  %165 = vmatprep.subr.bf16.mxu0 0
  %166 = vmatpush1.bf16.msra.mxu0 0
  %167 = vmatprep.subr.bf16.mxu0 0
  %168 = vmatpush1.bf16.msra.mxu0 0
  %169 = vmatprep.subr.bf16.mxu0 0
  %170 = vmatpush1.bf16.msra.mxu0 0
  %171 = vmatprep.subr.bf16.mxu0 0
  %172 = vmatpush1.bf16.msra.mxu0 0
  %173 = vmatprep.subr.bf16.mxu0 0
  %174 = vmatpush1.bf16.msra.mxu0 0
  %175 = vmatprep.subr.bf16.mxu0 0
  %176 = vmatpush1.bf16.msra.mxu0 0
  %177 = vmatprep.subr.bf16.mxu0 0
  %178 = vmatpush1.bf16.msra.mxu0 0
  %179 = vmatprep.subr.bf16.mxu0 0
  %180 = vmatpush1.bf16.msra.mxu0 0
  %181 = vmatprep.subr.bf16.mxu0 0
  %182 = vmatpush1.bf16.msra.mxu0 0
  %183 = vmatprep.subr.bf16.mxu0 0
  %184 = vmatpush1.bf16.msra.mxu0 0
  %185 = vmatprep.mubr.bf16.mxu0 0
  %186 = vmatmul.mubr.bf16.gmra.mrb[0].mxu0 %v106
  %v187 = vpop.f32.mrb[0].mxu0
  %v188 = vadd.f32 %v90, %v187
  %v189 = vpop.f32.mrb[0].mxu0
  %v190 = vpop.f32.mrb[0].mxu0
  %v191 = vadd.f32 %v90, %v190
  %v192 = vpop.f32.mrb[0].mxu0
  %193 = vmatprep.mubr.bf16.mxu0 0
  %194 = vmatmul.mubr.bf16.gmra.mrb[0].mxu0 %v109
  %v195 = vpop.f32.mrb[0].mxu0
  %v196 = vadd.f32 %v90, %v195
  %v197 = vpop.f32.mrb[0].mxu0
  %v198 = vpop.f32.mrb[0].mxu0
  %v199 = vadd.f32 %v90, %v198
  %v200 = vpop.f32.mrb[0].mxu0
  %201 = vmatprep.mubr.bf16.mxu0 0
  %202 = vmatmul.mubr.bf16.gmra.mrb[0].mxu0 %v112
  %v203 = vpop.f32.mrb[0].mxu0
  %v204 = vadd.f32 %v90, %v203
  %v205 = vpop.f32.mrb[0].mxu0
  %v206 = vpop.f32.mrb[0].mxu0
  %v207 = vadd.f32 %v90, %v206
  %v208 = vpop.f32.mrb[0].mxu0
  %209 = vmatprep.mubr.bf16.mxu0 0
  %210 = vmatmul.mubr.bf16.gmra.mrb[0].mxu0 %v115
  %v211 = vpop.f32.mrb[0].mxu0
  %v212 = vadd.f32 %v90, %v211
  %v213 = vpop.f32.mrb[0].mxu0
  %v214 = vpop.f32.mrb[0].mxu0
  %v215 = vadd.f32 %v90, %v214
  %v216 = vpop.f32.mrb[0].mxu0
  %217 = vmatprep.mubr.bf16.mxu0 0
  %218 = vmatmul.mubr.bf16.gmra.mrb[0].mxu0 %v118
  %v219 = vpop.f32.mrb[0].mxu0
  %v220 = vadd.f32 %v90, %v219
  %v221 = vpop.f32.mrb[0].mxu0
  %v222 = vpop.f32.mrb[0].mxu0
  %v223 = vadd.f32 %v90, %v222
  %v224 = vpop.f32.mrb[0].mxu0
  %225 = vmatprep.mubr.bf16.mxu0 0
  %226 = vmatmul.mubr.bf16.gmra.mrb[0].mxu0 %v121
  %v227 = vpop.f32.mrb[0].mxu0
  %v228 = vadd.f32 %v90, %v227
  %v229 = vpop.f32.mrb[0].mxu0
  %v230 = vpop.f32.mrb[0].mxu0
  %v231 = vadd.f32 %v90, %v230
  %v232 = vpop.f32.mrb[0].mxu0
  %233 = vmatprep.mubr.bf16.mxu0 0
  %234 = vmatmul.mubr.bf16.gmra.mrb[0].mxu0 %v124
  %v235 = vpop.f32.mrb[0].mxu0
  %v236 = vadd.f32 %v90, %v235
  %v237 = vpop.f32.mrb[0].mxu0
  %v238 = vpop.f32.mrb[0].mxu0
  %v239 = vadd.f32 %v90, %v238
  %v240 = vpop.f32.mrb[0].mxu0
  %241 = vmatprep.mubr.bf16.mxu0 0
  %242 = vmatmul.mubr.bf16.gmra.mrb[0].mxu0 %v127
  %v243 = vpop.f32.mrb[0].mxu0
  %v244 = vadd.f32 %v90, %v243
  %v245 = vpop.f32.mrb[0].mxu0
  %v246 = vpop.f32.mrb[0].mxu0
  %v247 = vadd.f32 %v90, %v246
  %v248 = vpop.f32.mrb[0].mxu0
  %249 = vmatprep.mubr.bf16.mxu0 0
  %250 = vmatmul.mubr.bf16.gmra.mrb[0].mxu0 %v130
  %v251 = vpop.f32.mrb[0].mxu0
  %v252 = vadd.f32 %v90, %v251
  %v253 = vpop.f32.mrb[0].mxu0
  %v254 = vpop.f32.mrb[0].mxu0
  %v255 = vadd.f32 %v90, %v254
  %v256 = vpop.f32.mrb[0].mxu0
  %257 = vmatprep.mubr.bf16.mxu0 0
  %258 = vmatmul.mubr.bf16.gmra.mrb[0].mxu0 %v133
  %v259 = vpop.f32.mrb[0].mxu0
  %v260 = vadd.f32 %v90, %v259
  %v261 = vpop.f32.mrb[0].mxu0
  %v262 = vpop.f32.mrb[0].mxu0
  %v263 = vadd.f32 %v90, %v262
  %v264 = vpop.f32.mrb[0].mxu0
  %265 = vmatprep.mubr.bf16.mxu0 0
  %266 = vmatmul.mubr.bf16.gmra.mrb[0].mxu0 %v136
  %v267 = vpop.f32.mrb[0].mxu0
  %v268 = vadd.f32 %v90, %v267
  %v269 = vpop.f32.mrb[0].mxu0
  %v270 = vpop.f32.mrb[0].mxu0
  %v271 = vadd.f32 %v90, %v270
  %v272 = vpop.f32.mrb[0].mxu0
  %273 = vmatprep.mubr.bf16.mxu0 0
  %274 = vmatmul.mubr.bf16.gmra.mrb[0].mxu0 %v139
  %v275 = vpop.f32.mrb[0].mxu0
  %v276 = vadd.f32 %v90, %v275
  %v277 = vpop.f32.mrb[0].mxu0
  %v278 = vpop.f32.mrb[0].mxu0
  %v279 = vadd.f32 %v90, %v278
  %v280 = vpop.f32.mrb[0].mxu0
  %281 = vmatprep.mubr.bf16.mxu0 0
  %282 = vmatmul.mubr.bf16.gmra.mrb[0].mxu0 %v142
  %v283 = vpop.f32.mrb[0].mxu0
  %v284 = vadd.f32 %v90, %v283
  %v285 = vpop.f32.mrb[0].mxu0
  %v286 = vpop.f32.mrb[0].mxu0
  %v287 = vadd.f32 %v90, %v286
  %v288 = vpop.f32.mrb[0].mxu0
  %289 = vmatprep.mubr.bf16.mxu0 0
  %290 = vmatmul.mubr.bf16.gmra.mrb[0].mxu0 %v145
  %v291 = vpop.f32.mrb[0].mxu0
  %v292 = vadd.f32 %v90, %v291
  %v293 = vpop.f32.mrb[0].mxu0
  %v294 = vpop.f32.mrb[0].mxu0
  %v295 = vadd.f32 %v90, %v294
  %v296 = vpop.f32.mrb[0].mxu0
  %297 = vmatprep.mubr.bf16.mxu0 0
  %298 = vmatmul.mubr.bf16.gmra.mrb[0].mxu0 %v148
  %v299 = vpop.f32.mrb[0].mxu0
  %v300 = vadd.f32 %v90, %v299
  %v301 = vpop.f32.mrb[0].mxu0
  %v302 = vpop.f32.mrb[0].mxu0
  %v303 = vadd.f32 %v90, %v302
  %v304 = vpop.f32.mrb[0].mxu0
  %305 = vmatprep.mubr.bf16.mxu0 0
  %306 = vmatmul.mubr.bf16.gmra.mrb[0].mxu0 %v151
  %v307 = vpop.f32.mrb[0].mxu0
  %v308 = vadd.f32 %v90, %v307
  %v309 = vpop.f32.mrb[0].mxu0
  %v310 = vpop.f32.mrb[0].mxu0
  %v311 = vadd.f32 %v90, %v310
  %v312 = vpop.f32.mrb[0].mxu0
  %313 = vdwg.mxu0
  %v314 = vmax.f32 %v188, 0.0
  %v315 = vmax.f32 %v191, 0.0
  %v316 = vmax.f32 %v196, 0.0
  %v317 = vmax.f32 %v199, 0.0
  %v318 = vmax.f32 %v204, 0.0
  %v319 = vmax.f32 %v207, 0.0
  %v320 = vmax.f32 %v212, 0.0
  %v321 = vmax.f32 %v215, 0.0
  %v322 = vmax.f32 %v220, 0.0
  %v323 = vmax.f32 %v223, 0.0
  %v324 = vmax.f32 %v228, 0.0
  %v325 = vmax.f32 %v231, 0.0
  %v326 = vmax.f32 %v236, 0.0
  %v327 = vmax.f32 %v239, 0.0
  %v328 = vmax.f32 %v244, 0.0
  %v329 = vmax.f32 %v247, 0.0
  %v330 = vmax.f32 %v252, 0.0
  %v331 = vmax.f32 %v255, 0.0
  %v332 = vmax.f32 %v260, 0.0
  %v333 = vmax.f32 %v263, 0.0
  %v334 = vmax.f32 %v268, 0.0
  %v335 = vmax.f32 %v271, 0.0
  %v336 = vmax.f32 %v276, 0.0
  %v337 = vmax.f32 %v279, 0.0
  %v338 = vmax.f32 %v284, 0.0
  %v339 = vmax.f32 %v287, 0.0
  %v340 = vmax.f32 %v292, 0.0
  %v341 = vmax.f32 %v295, 0.0
  %v342 = vmax.f32 %v300, 0.0
  %v343 = vmax.f32 %v303, 0.0
  %v344 = vmax.f32 %v308, 0.0
  %v345 = vmax.f32 %v311, 0.0
  %v346 = vpack.c.bf16 %v315, %v314
  %v347 = vpack.c.bf16 %v317, %v316
  %v348 = vpack.c.bf16 %v319, %v318
  %v349 = vpack.c.bf16 %v321, %v320
  %v350 = vpack.c.bf16 %v323, %v322
  %v351 = vpack.c.bf16 %v325, %v324
  %v352 = vpack.c.bf16 %v327, %v326
  %v353 = vpack.c.bf16 %v329, %v328
  %v354 = vpack.c.bf16 %v331, %v330
  %v355 = vpack.c.bf16 %v333, %v332
  %v356 = vpack.c.bf16 %v335, %v334
  %v357 = vpack.c.bf16 %v337, %v336
  %v358 = vpack.c.bf16 %v339, %v338
  %v359 = vpack.c.bf16 %v341, %v340
  %v360 = vpack.c.bf16 %v343, %v342
  %v361 = vpack.c.bf16 %v345, %v344
  %v362 = vld [vmem:[%s3] sm:$0xf]
  %v363 = vld [vmem:[%s3 + $0x4] sm:$0xf]
  %v364 = vld [vmem:[%s3 + $0x8] sm:$0xf]
  %v365 = vld [vmem:[%s3 + $0xc] sm:$0xf]
  %v366 = vld [vmem:[%s3 + $0x10] sm:$0xf]
  %v367 = vld [vmem:[%s3 + $0x14] sm:$0xf]
  %v368 = vld [vmem:[%s3 + $0x18] sm:$0xf]
  %v369 = vld [vmem:[%s3 + $0x1c] sm:$0xf]
  %v370 = vld [vmem:[%s3 + $0x20] sm:$0xf]
  %v371 = vld [vmem:[%s3 + $0x24] sm:$0xf]
  %v372 = vld [vmem:[%s3 + $0x28] sm:$0xf]
  %v373 = vld [vmem:[%s3 + $0x2c] sm:$0xf]
  %v374 = vld [vmem:[%s3 + $0x30] sm:$0xf]
  %v375 = vld [vmem:[%s3 + $0x34] sm:$0xf]
  %v376 = vld [vmem:[%s3 + $0x38] sm:$0xf]
  %v377 = vld [vmem:[%s3 + $0x3c] sm:$0xf]
  %v378 = vld [vmem:[%s4] sm:$0x1]
  %v380 = vlaneseq
  %v381 = vshrl.u32 %v380, 7
  %v382 = vsub.s32 0, %v381
  %v383 = vrot.slane %v378, %v382
  %v401 = vunpack.c.l.b16 %v362
  %v402 = vunpack.c.l.b16 %v363
  %v403 = vunpack.c.l.b16 %v364
  %v404 = vunpack.c.l.b16 %v365
  %v405 = vunpack.c.l.b16 %v366
  %v406 = vunpack.c.l.b16 %v367
  %v407 = vunpack.c.l.b16 %v368
  %v408 = vunpack.c.l.b16 %v369
  %v409 = vunpack.c.l.b16 %v370
  %v410 = vunpack.c.l.b16 %v371
  %v411 = vunpack.c.l.b16 %v372
  %v412 = vunpack.c.l.b16 %v373
  %v413 = vunpack.c.l.b16 %v374
  %v414 = vunpack.c.l.b16 %v375
  %v415 = vunpack.c.l.b16 %v376
  %v416 = vunpack.c.l.b16 %v377
  %v417 = vpack.c.b16 %v402, %v401
  %v418 = vpack.c.b16 %v404, %v403
  %v419 = vpack.c.b16 %v406, %v405
  %v420 = vpack.c.b16 %v408, %v407
  %v421 = vpack.c.b16 %v410, %v409
  %v422 = vpack.c.b16 %v412, %v411
  %v423 = vpack.c.b16 %v414, %v413
  %v424 = vpack.c.b16 %v416, %v415
  %433 = vmatprep.subr.bf16.mxu0 0
  %434 = vmatpush1.bf16.msra.mxu0 %v417
  %435 = vmatprep.subr.bf16.mxu0 0
  %436 = vmatpush1.bf16.msra.mxu0 %v418
  %437 = vmatprep.subr.bf16.mxu0 0
  %438 = vmatpush1.bf16.msra.mxu0 %v419
  %439 = vmatprep.subr.bf16.mxu0 0
  %440 = vmatpush1.bf16.msra.mxu0 %v420
  %441 = vmatprep.subr.bf16.mxu0 0
  %442 = vmatpush1.bf16.msra.mxu0 %v421
  %443 = vmatprep.subr.bf16.mxu0 0
  %444 = vmatpush1.bf16.msra.mxu0 %v422
  %445 = vmatprep.subr.bf16.mxu0 0
  %446 = vmatpush1.bf16.msra.mxu0 %v423
  %447 = vmatprep.subr.bf16.mxu0 0
  %448 = vmatpush1.bf16.msra.mxu0 %v424
  %449 = vmatprep.subr.bf16.mxu0 0
  %450 = vmatpush1.bf16.msra.mxu0 0
  %451 = vmatprep.subr.bf16.mxu0 0
  %452 = vmatpush1.bf16.msra.mxu0 0
  %453 = vmatprep.subr.bf16.mxu0 0
  %454 = vmatpush1.bf16.msra.mxu0 0
  %455 = vmatprep.subr.bf16.mxu0 0
  %456 = vmatpush1.bf16.msra.mxu0 0
  %457 = vmatprep.subr.bf16.mxu0 0
  %458 = vmatpush1.bf16.msra.mxu0 0
  %459 = vmatprep.subr.bf16.mxu0 0
  %460 = vmatpush1.bf16.msra.mxu0 0
  %461 = vmatprep.subr.bf16.mxu0 0
  %462 = vmatpush1.bf16.msra.mxu0 0
  %463 = vmatprep.subr.bf16.mxu0 0
  %464 = vmatpush1.bf16.msra.mxu0 0
  %465 = vmatprep.mubr.bf16.mxu0 0
  %466 = vmatmul.mubr.bf16.gmra.mrb[0].mxu0 %v346
  %v467 = vpop.f32.mrb[0].mxu0
  %v468 = vadd.f32 %v383, %v467
  %v469 = vpop.f32.mrb[0].mxu0
  %v470 = vpop.f32.mrb[0].mxu0
  %v471 = vadd.f32 %v383, %v470
  %v472 = vpop.f32.mrb[0].mxu0
  %473 = vmatprep.mubr.bf16.mxu0 0
  %474 = vmatmul.mubr.bf16.gmra.mrb[0].mxu0 %v347
  %v475 = vpop.f32.mrb[0].mxu0
  %v476 = vadd.f32 %v383, %v475
  %v477 = vpop.f32.mrb[0].mxu0
  %v478 = vpop.f32.mrb[0].mxu0
  %v479 = vadd.f32 %v383, %v478
  %v480 = vpop.f32.mrb[0].mxu0
  %481 = vmatprep.mubr.bf16.mxu0 0
  %482 = vmatmul.mubr.bf16.gmra.mrb[0].mxu0 %v348
  %v483 = vpop.f32.mrb[0].mxu0
  %v484 = vadd.f32 %v383, %v483
  %v485 = vpop.f32.mrb[0].mxu0
  %v486 = vpop.f32.mrb[0].mxu0
  %v487 = vadd.f32 %v383, %v486
  %v488 = vpop.f32.mrb[0].mxu0
  %489 = vmatprep.mubr.bf16.mxu0 0
  %490 = vmatmul.mubr.bf16.gmra.mrb[0].mxu0 %v349
  %v491 = vpop.f32.mrb[0].mxu0
  %v492 = vadd.f32 %v383, %v491
  %v493 = vpop.f32.mrb[0].mxu0
  %v494 = vpop.f32.mrb[0].mxu0
  %v495 = vadd.f32 %v383, %v494
  %v496 = vpop.f32.mrb[0].mxu0
  %497 = vmatprep.mubr.bf16.mxu0 0
  %498 = vmatmul.mubr.bf16.gmra.mrb[0].mxu0 %v350
  %v499 = vpop.f32.mrb[0].mxu0
  %v500 = vadd.f32 %v383, %v499
  %v501 = vpop.f32.mrb[0].mxu0
  %v502 = vpop.f32.mrb[0].mxu0
  %v503 = vadd.f32 %v383, %v502
  %v504 = vpop.f32.mrb[0].mxu0
  %505 = vmatprep.mubr.bf16.mxu0 0
  %506 = vmatmul.mubr.bf16.gmra.mrb[0].mxu0 %v351
  %v507 = vpop.f32.mrb[0].mxu0
  %v508 = vadd.f32 %v383, %v507
  %v509 = vpop.f32.mrb[0].mxu0
  %v510 = vpop.f32.mrb[0].mxu0
  %v511 = vadd.f32 %v383, %v510
  %v512 = vpop.f32.mrb[0].mxu0
  %513 = vmatprep.mubr.bf16.mxu0 0
  %514 = vmatmul.mubr.bf16.gmra.mrb[0].mxu0 %v352
  %v515 = vpop.f32.mrb[0].mxu0
  %v516 = vadd.f32 %v383, %v515
  %v517 = vpop.f32.mrb[0].mxu0
  %v518 = vpop.f32.mrb[0].mxu0
  %v519 = vadd.f32 %v383, %v518
  %v520 = vpop.f32.mrb[0].mxu0
  %521 = vmatprep.mubr.bf16.mxu0 0
  %522 = vmatmul.mubr.bf16.gmra.mrb[0].mxu0 %v353
  %v523 = vpop.f32.mrb[0].mxu0
  %v524 = vadd.f32 %v383, %v523
  %v525 = vpop.f32.mrb[0].mxu0
  %v526 = vpop.f32.mrb[0].mxu0
  %v527 = vadd.f32 %v383, %v526
  %v528 = vpop.f32.mrb[0].mxu0
  %529 = vmatprep.mubr.bf16.mxu0 0
  %530 = vmatmul.mubr.bf16.gmra.mrb[0].mxu0 %v354
  %v531 = vpop.f32.mrb[0].mxu0
  %v532 = vadd.f32 %v383, %v531
  %v533 = vpop.f32.mrb[0].mxu0
  %v534 = vpop.f32.mrb[0].mxu0
  %v535 = vadd.f32 %v383, %v534
  %v536 = vpop.f32.mrb[0].mxu0
  %537 = vmatprep.mubr.bf16.mxu0 0
  %538 = vmatmul.mubr.bf16.gmra.mrb[0].mxu0 %v355
  %v539 = vpop.f32.mrb[0].mxu0
  %v540 = vadd.f32 %v383, %v539
  %v541 = vpop.f32.mrb[0].mxu0
  %v542 = vpop.f32.mrb[0].mxu0
  %v543 = vadd.f32 %v383, %v542
  %v544 = vpop.f32.mrb[0].mxu0
  %545 = vmatprep.mubr.bf16.mxu0 0
  %546 = vmatmul.mubr.bf16.gmra.mrb[0].mxu0 %v356
  %v547 = vpop.f32.mrb[0].mxu0
  %v548 = vadd.f32 %v383, %v547
  %v549 = vpop.f32.mrb[0].mxu0
  %v550 = vpop.f32.mrb[0].mxu0
  %v551 = vadd.f32 %v383, %v550
  %v552 = vpop.f32.mrb[0].mxu0
  %553 = vmatprep.mubr.bf16.mxu0 0
  %554 = vmatmul.mubr.bf16.gmra.mrb[0].mxu0 %v357
  %v555 = vpop.f32.mrb[0].mxu0
  %v556 = vadd.f32 %v383, %v555
  %v557 = vpop.f32.mrb[0].mxu0
  %v558 = vpop.f32.mrb[0].mxu0
  %v559 = vadd.f32 %v383, %v558
  %v560 = vpop.f32.mrb[0].mxu0
  %561 = vmatprep.mubr.bf16.mxu0 0
  %562 = vmatmul.mubr.bf16.gmra.mrb[0].mxu0 %v358
  %v563 = vpop.f32.mrb[0].mxu0
  %v564 = vadd.f32 %v383, %v563
  %v565 = vpop.f32.mrb[0].mxu0
  %v566 = vpop.f32.mrb[0].mxu0
  %v567 = vadd.f32 %v383, %v566
  %v568 = vpop.f32.mrb[0].mxu0
  %569 = vmatprep.mubr.bf16.mxu0 0
  %570 = vmatmul.mubr.bf16.gmra.mrb[0].mxu0 %v359
  %v571 = vpop.f32.mrb[0].mxu0
  %v572 = vadd.f32 %v383, %v571
  %v573 = vpop.f32.mrb[0].mxu0
  %v574 = vpop.f32.mrb[0].mxu0
  %v575 = vadd.f32 %v383, %v574
  %v576 = vpop.f32.mrb[0].mxu0
  %577 = vmatprep.mubr.bf16.mxu0 0
  %578 = vmatmul.mubr.bf16.gmra.mrb[0].mxu0 %v360
  %v579 = vpop.f32.mrb[0].mxu0
  %v580 = vadd.f32 %v383, %v579
  %v581 = vpop.f32.mrb[0].mxu0
  %v582 = vpop.f32.mrb[0].mxu0
  %v583 = vadd.f32 %v383, %v582
  %v584 = vpop.f32.mrb[0].mxu0
  %585 = vmatprep.mubr.bf16.mxu0 0
  %586 = vmatmul.mubr.bf16.gmra.mrb[0].mxu0 %v361
  %v587 = vpop.f32.mrb[0].mxu0
  %v588 = vadd.f32 %v383, %v587
  %v589 = vpop.f32.mrb[0].mxu0
  %v590 = vpop.f32.mrb[0].mxu0
  %v591 = vadd.f32 %v383, %v590
  %v592 = vpop.f32.mrb[0].mxu0
  %593 = vdwg.mxu0
  %v594 = vmax.f32 %v468, 0.0
  %v595 = vmax.f32 %v471, 0.0
  %v596 = vmax.f32 %v476, 0.0
  %v597 = vmax.f32 %v479, 0.0
  %v598 = vmax.f32 %v484, 0.0
  %v599 = vmax.f32 %v487, 0.0
  %v600 = vmax.f32 %v492, 0.0
  %v601 = vmax.f32 %v495, 0.0
  %v602 = vmax.f32 %v500, 0.0
  %v603 = vmax.f32 %v503, 0.0
  %v604 = vmax.f32 %v508, 0.0
  %v605 = vmax.f32 %v511, 0.0
  %v606 = vmax.f32 %v516, 0.0
  %v607 = vmax.f32 %v519, 0.0
  %v608 = vmax.f32 %v524, 0.0
  %v609 = vmax.f32 %v527, 0.0
  %v610 = vmax.f32 %v532, 0.0
  %v611 = vmax.f32 %v535, 0.0
  %v612 = vmax.f32 %v540, 0.0
  %v613 = vmax.f32 %v543, 0.0
  %v614 = vmax.f32 %v548, 0.0
  %v615 = vmax.f32 %v551, 0.0
  %v616 = vmax.f32 %v556, 0.0
  %v617 = vmax.f32 %v559, 0.0
  %v618 = vmax.f32 %v564, 0.0
  %v619 = vmax.f32 %v567, 0.0
  %v620 = vmax.f32 %v572, 0.0
  %v621 = vmax.f32 %v575, 0.0
  %v622 = vmax.f32 %v580, 0.0
  %v623 = vmax.f32 %v583, 0.0
  %v624 = vmax.f32 %v588, 0.0
  %v625 = vmax.f32 %v591, 0.0
  %v626 = vpack.c.bf16 %v595, %v594
  %v627 = vpack.c.bf16 %v597, %v596
  %v628 = vpack.c.bf16 %v599, %v598
  %v629 = vpack.c.bf16 %v601, %v600
  %v630 = vpack.c.bf16 %v603, %v602
  %v631 = vpack.c.bf16 %v605, %v604
  %v632 = vpack.c.bf16 %v607, %v606
  %v633 = vpack.c.bf16 %v609, %v608
  %v634 = vpack.c.bf16 %v611, %v610
  %v635 = vpack.c.bf16 %v613, %v612
  %v636 = vpack.c.bf16 %v615, %v614
  %v637 = vpack.c.bf16 %v617, %v616
  %v638 = vpack.c.bf16 %v619, %v618
  %v639 = vpack.c.bf16 %v621, %v620
  %v640 = vpack.c.bf16 %v623, %v622
  %v641 = vpack.c.bf16 %v625, %v624
  %v642 = vld [vmem:[%s5] sm:$0xf]
  %v643 = vld [vmem:[%s5 + $0x4] sm:$0xf]
  %v644 = vld [vmem:[%s5 + $0x8] sm:$0xf]
  %v645 = vld [vmem:[%s5 + $0xc] sm:$0xf]
  %v646 = vld [vmem:[%s5 + $0x10] sm:$0xf]
  %v647 = vld [vmem:[%s5 + $0x14] sm:$0xf]
  %v648 = vld [vmem:[%s5 + $0x18] sm:$0xf]
  %v649 = vld [vmem:[%s5 + $0x1c] sm:$0xf]
  %v650 = vld [vmem:[%s5 + $0x20] sm:$0xf]
  %v651 = vld [vmem:[%s5 + $0x24] sm:$0xf]
  %v652 = vld [vmem:[%s5 + $0x28] sm:$0xf]
  %v653 = vld [vmem:[%s5 + $0x2c] sm:$0xf]
  %v654 = vld [vmem:[%s5 + $0x30] sm:$0xf]
  %v655 = vld [vmem:[%s5 + $0x34] sm:$0xf]
  %v656 = vld [vmem:[%s5 + $0x38] sm:$0xf]
  %v657 = vld [vmem:[%s5 + $0x3c] sm:$0xf]
  %v658 = vld [vmem:[%s6] sm:$0x1]
  %v660 = vlaneseq
  %v661 = vshrl.u32 %v660, 7
  %v662 = vsub.s32 0, %v661
  %v663 = vrot.slane %v658, %v662
  %v681 = vunpack.c.l.b16 %v642
  %v682 = vunpack.c.l.b16 %v643
  %v683 = vunpack.c.l.b16 %v644
  %v684 = vunpack.c.l.b16 %v645
  %v685 = vunpack.c.l.b16 %v646
  %v686 = vunpack.c.l.b16 %v647
  %v687 = vunpack.c.l.b16 %v648
  %v688 = vunpack.c.l.b16 %v649
  %v689 = vunpack.c.l.b16 %v650
  %v690 = vunpack.c.l.b16 %v651
  %v691 = vunpack.c.l.b16 %v652
  %v692 = vunpack.c.l.b16 %v653
  %v693 = vunpack.c.l.b16 %v654
  %v694 = vunpack.c.l.b16 %v655
  %v695 = vunpack.c.l.b16 %v656
  %v696 = vunpack.c.l.b16 %v657
  %v697 = vpack.c.b16 %v682, %v681
  %v698 = vpack.c.b16 %v684, %v683
  %v699 = vpack.c.b16 %v686, %v685
  %v700 = vpack.c.b16 %v688, %v687
  %v701 = vpack.c.b16 %v690, %v689
  %v702 = vpack.c.b16 %v692, %v691
  %v703 = vpack.c.b16 %v694, %v693
  %v704 = vpack.c.b16 %v696, %v695
  %713 = vmatprep.subr.bf16.mxu0 0
  %714 = vmatpush1.bf16.msra.mxu0 %v697
  %715 = vmatprep.subr.bf16.mxu0 0
  %716 = vmatpush1.bf16.msra.mxu0 %v698
  %717 = vmatprep.subr.bf16.mxu0 0
  %718 = vmatpush1.bf16.msra.mxu0 %v699
  %719 = vmatprep.subr.bf16.mxu0 0
  %720 = vmatpush1.bf16.msra.mxu0 %v700
  %721 = vmatprep.subr.bf16.mxu0 0
  %722 = vmatpush1.bf16.msra.mxu0 %v701
  %723 = vmatprep.subr.bf16.mxu0 0
  %724 = vmatpush1.bf16.msra.mxu0 %v702
  %725 = vmatprep.subr.bf16.mxu0 0
  %726 = vmatpush1.bf16.msra.mxu0 %v703
  %727 = vmatprep.subr.bf16.mxu0 0
  %728 = vmatpush1.bf16.msra.mxu0 %v704
  %729 = vmatprep.subr.bf16.mxu0 0
  %730 = vmatpush1.bf16.msra.mxu0 0
  %731 = vmatprep.subr.bf16.mxu0 0
  %732 = vmatpush1.bf16.msra.mxu0 0
  %733 = vmatprep.subr.bf16.mxu0 0
  %734 = vmatpush1.bf16.msra.mxu0 0
  %735 = vmatprep.subr.bf16.mxu0 0
  %736 = vmatpush1.bf16.msra.mxu0 0
  %737 = vmatprep.subr.bf16.mxu0 0
  %738 = vmatpush1.bf16.msra.mxu0 0
  %739 = vmatprep.subr.bf16.mxu0 0
  %740 = vmatpush1.bf16.msra.mxu0 0
  %741 = vmatprep.subr.bf16.mxu0 0
  %742 = vmatpush1.bf16.msra.mxu0 0
  %743 = vmatprep.subr.bf16.mxu0 0
  %744 = vmatpush1.bf16.msra.mxu0 0
  %745 = vmatprep.mubr.bf16.mxu0 0
  %746 = vmatmul.mubr.bf16.gmra.mrb[0].mxu0 %v626
  %v747 = vpop.f32.mrb[0].mxu0
  %v748 = vadd.f32 %v663, %v747
  %v749 = vpop.f32.mrb[0].mxu0
  %v750 = vpop.f32.mrb[0].mxu0
  %v751 = vadd.f32 %v663, %v750
  %v752 = vpop.f32.mrb[0].mxu0
  %753 = vmatprep.mubr.bf16.mxu0 0
  %754 = vmatmul.mubr.bf16.gmra.mrb[0].mxu0 %v627
  %v755 = vpop.f32.mrb[0].mxu0
  %v756 = vadd.f32 %v663, %v755
  %v757 = vpop.f32.mrb[0].mxu0
  %v758 = vpop.f32.mrb[0].mxu0
  %v759 = vadd.f32 %v663, %v758
  %v760 = vpop.f32.mrb[0].mxu0
  %761 = vmatprep.mubr.bf16.mxu0 0
  %762 = vmatmul.mubr.bf16.gmra.mrb[0].mxu0 %v628
  %v763 = vpop.f32.mrb[0].mxu0
  %v764 = vadd.f32 %v663, %v763
  %v765 = vpop.f32.mrb[0].mxu0
  %v766 = vpop.f32.mrb[0].mxu0
  %v767 = vadd.f32 %v663, %v766
  %v768 = vpop.f32.mrb[0].mxu0
  %769 = vmatprep.mubr.bf16.mxu0 0
  %770 = vmatmul.mubr.bf16.gmra.mrb[0].mxu0 %v629
  %v771 = vpop.f32.mrb[0].mxu0
  %v772 = vadd.f32 %v663, %v771
  %v773 = vpop.f32.mrb[0].mxu0
  %v774 = vpop.f32.mrb[0].mxu0
  %v775 = vadd.f32 %v663, %v774
  %v776 = vpop.f32.mrb[0].mxu0
  %777 = vmatprep.mubr.bf16.mxu0 0
  %778 = vmatmul.mubr.bf16.gmra.mrb[0].mxu0 %v630
  %v779 = vpop.f32.mrb[0].mxu0
  %v780 = vadd.f32 %v663, %v779
  %v781 = vpop.f32.mrb[0].mxu0
  %v782 = vpop.f32.mrb[0].mxu0
  %v783 = vadd.f32 %v663, %v782
  %v784 = vpop.f32.mrb[0].mxu0
  %785 = vmatprep.mubr.bf16.mxu0 0
  %786 = vmatmul.mubr.bf16.gmra.mrb[0].mxu0 %v631
  %v787 = vpop.f32.mrb[0].mxu0
  %v788 = vadd.f32 %v663, %v787
  %v789 = vpop.f32.mrb[0].mxu0
  %v790 = vpop.f32.mrb[0].mxu0
  %v791 = vadd.f32 %v663, %v790
  %v792 = vpop.f32.mrb[0].mxu0
  %793 = vmatprep.mubr.bf16.mxu0 0
  %794 = vmatmul.mubr.bf16.gmra.mrb[0].mxu0 %v632
  %v795 = vpop.f32.mrb[0].mxu0
  %v796 = vadd.f32 %v663, %v795
  %v797 = vpop.f32.mrb[0].mxu0
  %v798 = vpop.f32.mrb[0].mxu0
  %v799 = vadd.f32 %v663, %v798
  %v800 = vpop.f32.mrb[0].mxu0
  %801 = vmatprep.mubr.bf16.mxu0 0
  %802 = vmatmul.mubr.bf16.gmra.mrb[0].mxu0 %v633
  %v803 = vpop.f32.mrb[0].mxu0
  %v804 = vadd.f32 %v663, %v803
  %v805 = vpop.f32.mrb[0].mxu0
  %v806 = vpop.f32.mrb[0].mxu0
  %v807 = vadd.f32 %v663, %v806
  %v808 = vpop.f32.mrb[0].mxu0
  %809 = vmatprep.mubr.bf16.mxu0 0
  %810 = vmatmul.mubr.bf16.gmra.mrb[0].mxu0 %v634
  %v811 = vpop.f32.mrb[0].mxu0
  %v812 = vadd.f32 %v663, %v811
  %v813 = vpop.f32.mrb[0].mxu0
  %v814 = vpop.f32.mrb[0].mxu0
  %v815 = vadd.f32 %v663, %v814
  %v816 = vpop.f32.mrb[0].mxu0
  %817 = vmatprep.mubr.bf16.mxu0 0
  %818 = vmatmul.mubr.bf16.gmra.mrb[0].mxu0 %v635
  %v819 = vpop.f32.mrb[0].mxu0
  %v820 = vadd.f32 %v663, %v819
  %v821 = vpop.f32.mrb[0].mxu0
  %v822 = vpop.f32.mrb[0].mxu0
  %v823 = vadd.f32 %v663, %v822
  %v824 = vpop.f32.mrb[0].mxu0
  %825 = vmatprep.mubr.bf16.mxu0 0
  %826 = vmatmul.mubr.bf16.gmra.mrb[0].mxu0 %v636
  %v827 = vpop.f32.mrb[0].mxu0
  %v828 = vadd.f32 %v663, %v827
  %v829 = vpop.f32.mrb[0].mxu0
  %v830 = vpop.f32.mrb[0].mxu0
  %v831 = vadd.f32 %v663, %v830
  %v832 = vpop.f32.mrb[0].mxu0
  %833 = vmatprep.mubr.bf16.mxu0 0
  %834 = vmatmul.mubr.bf16.gmra.mrb[0].mxu0 %v637
  %v835 = vpop.f32.mrb[0].mxu0
  %v836 = vadd.f32 %v663, %v835
  %v837 = vpop.f32.mrb[0].mxu0
  %v838 = vpop.f32.mrb[0].mxu0
  %v839 = vadd.f32 %v663, %v838
  %v840 = vpop.f32.mrb[0].mxu0
  %841 = vmatprep.mubr.bf16.mxu0 0
  %842 = vmatmul.mubr.bf16.gmra.mrb[0].mxu0 %v638
  %v843 = vpop.f32.mrb[0].mxu0
  %v844 = vadd.f32 %v663, %v843
  %v845 = vpop.f32.mrb[0].mxu0
  %v846 = vpop.f32.mrb[0].mxu0
  %v847 = vadd.f32 %v663, %v846
  %v848 = vpop.f32.mrb[0].mxu0
  %849 = vmatprep.mubr.bf16.mxu0 0
  %850 = vmatmul.mubr.bf16.gmra.mrb[0].mxu0 %v639
  %v851 = vpop.f32.mrb[0].mxu0
  %v852 = vadd.f32 %v663, %v851
  %v853 = vpop.f32.mrb[0].mxu0
  %v854 = vpop.f32.mrb[0].mxu0
  %v855 = vadd.f32 %v663, %v854
  %v856 = vpop.f32.mrb[0].mxu0
  %857 = vmatprep.mubr.bf16.mxu0 0
  %858 = vmatmul.mubr.bf16.gmra.mrb[0].mxu0 %v640
  %v859 = vpop.f32.mrb[0].mxu0
  %v860 = vadd.f32 %v663, %v859
  %v861 = vpop.f32.mrb[0].mxu0
  %v862 = vpop.f32.mrb[0].mxu0
  %v863 = vadd.f32 %v663, %v862
  %v864 = vpop.f32.mrb[0].mxu0
  %865 = vmatprep.mubr.bf16.mxu0 0
  %866 = vmatmul.mubr.bf16.gmra.mrb[0].mxu0 %v641
  %v867 = vpop.f32.mrb[0].mxu0
  %v868 = vadd.f32 %v663, %v867
  %v869 = vpop.f32.mrb[0].mxu0
  %v870 = vpop.f32.mrb[0].mxu0
  %v871 = vadd.f32 %v663, %v870
  %v872 = vpop.f32.mrb[0].mxu0
  %873 = vdwg.mxu0
  %v874 = vmax.f32 %v748, 0.0
  %v875 = vmax.f32 %v751, 0.0
  %v876 = vmax.f32 %v756, 0.0
  %v877 = vmax.f32 %v759, 0.0
  %v878 = vmax.f32 %v764, 0.0
  %v879 = vmax.f32 %v767, 0.0
  %v880 = vmax.f32 %v772, 0.0
  %v881 = vmax.f32 %v775, 0.0
  %v882 = vmax.f32 %v780, 0.0
  %v883 = vmax.f32 %v783, 0.0
  %v884 = vmax.f32 %v788, 0.0
  %v885 = vmax.f32 %v791, 0.0
  %v886 = vmax.f32 %v796, 0.0
  %v887 = vmax.f32 %v799, 0.0
  %v888 = vmax.f32 %v804, 0.0
  %v889 = vmax.f32 %v807, 0.0
  %v890 = vmax.f32 %v812, 0.0
  %v891 = vmax.f32 %v815, 0.0
  %v892 = vmax.f32 %v820, 0.0
  %v893 = vmax.f32 %v823, 0.0
  %v894 = vmax.f32 %v828, 0.0
  %v895 = vmax.f32 %v831, 0.0
  %v896 = vmax.f32 %v836, 0.0
  %v897 = vmax.f32 %v839, 0.0
  %v898 = vmax.f32 %v844, 0.0
  %v899 = vmax.f32 %v847, 0.0
  %v900 = vmax.f32 %v852, 0.0
  %v901 = vmax.f32 %v855, 0.0
  %v902 = vmax.f32 %v860, 0.0
  %v903 = vmax.f32 %v863, 0.0
  %v904 = vmax.f32 %v868, 0.0
  %v905 = vmax.f32 %v871, 0.0
  %v906 = vpack.c.bf16 %v875, %v874
  %v907 = vpack.c.bf16 %v877, %v876
  %v908 = vpack.c.bf16 %v879, %v878
  %v909 = vpack.c.bf16 %v881, %v880
  %v910 = vpack.c.bf16 %v883, %v882
  %v911 = vpack.c.bf16 %v885, %v884
  %v912 = vpack.c.bf16 %v887, %v886
  %v913 = vpack.c.bf16 %v889, %v888
  %v914 = vpack.c.bf16 %v891, %v890
  %v915 = vpack.c.bf16 %v893, %v892
  %v916 = vpack.c.bf16 %v895, %v894
  %v917 = vpack.c.bf16 %v897, %v896
  %v918 = vpack.c.bf16 %v899, %v898
  %v919 = vpack.c.bf16 %v901, %v900
  %v920 = vpack.c.bf16 %v903, %v902
  %v921 = vpack.c.bf16 %v905, %v904
  %v922 = vld [vmem:[%s7] sm:$0xf]
  %v923 = vld [vmem:[%s7 + $0x4] sm:$0xf]
  %v924 = vld [vmem:[%s7 + $0x8] sm:$0xf]
  %v925 = vld [vmem:[%s7 + $0xc] sm:$0xf]
  %v926 = vld [vmem:[%s7 + $0x10] sm:$0xf]
  %v927 = vld [vmem:[%s7 + $0x14] sm:$0xf]
  %v928 = vld [vmem:[%s7 + $0x18] sm:$0xf]
  %v929 = vld [vmem:[%s7 + $0x1c] sm:$0xf]
  %v930 = vld [vmem:[%s7 + $0x20] sm:$0xf]
  %v931 = vld [vmem:[%s7 + $0x24] sm:$0xf]
  %v932 = vld [vmem:[%s7 + $0x28] sm:$0xf]
  %v933 = vld [vmem:[%s7 + $0x2c] sm:$0xf]
  %v934 = vld [vmem:[%s7 + $0x30] sm:$0xf]
  %v935 = vld [vmem:[%s7 + $0x34] sm:$0xf]
  %v936 = vld [vmem:[%s7 + $0x38] sm:$0xf]
  %v937 = vld [vmem:[%s7 + $0x3c] sm:$0xf]
  %v938 = vld [vmem:[%s8] sm:$0x1]
  %v940 = vlaneseq
  %v941 = vshrl.u32 %v940, 7
  %v942 = vsub.s32 0, %v941
  %v943 = vrot.slane %v938, %v942
  %v961 = vunpack.c.l.b16 %v922
  %v962 = vunpack.c.l.b16 %v923
  %v963 = vunpack.c.l.b16 %v924
  %v964 = vunpack.c.l.b16 %v925
  %v965 = vunpack.c.l.b16 %v926
  %v966 = vunpack.c.l.b16 %v927
  %v967 = vunpack.c.l.b16 %v928
  %v968 = vunpack.c.l.b16 %v929
  %v969 = vunpack.c.l.b16 %v930
  %v970 = vunpack.c.l.b16 %v931
  %v971 = vunpack.c.l.b16 %v932
  %v972 = vunpack.c.l.b16 %v933
  %v973 = vunpack.c.l.b16 %v934
  %v974 = vunpack.c.l.b16 %v935
  %v975 = vunpack.c.l.b16 %v936
  %v976 = vunpack.c.l.b16 %v937
  %v977 = vpack.c.b16 %v962, %v961
  %v978 = vpack.c.b16 %v964, %v963
  %v979 = vpack.c.b16 %v966, %v965
  %v980 = vpack.c.b16 %v968, %v967
  %v981 = vpack.c.b16 %v970, %v969
  %v982 = vpack.c.b16 %v972, %v971
  %v983 = vpack.c.b16 %v974, %v973
  %v984 = vpack.c.b16 %v976, %v975
  %993 = vmatprep.subr.bf16.mxu0 0
  %994 = vmatpush1.bf16.msra.mxu0 %v977
  %995 = vmatprep.subr.bf16.mxu0 0
  %996 = vmatpush1.bf16.msra.mxu0 %v978
  %997 = vmatprep.subr.bf16.mxu0 0
  %998 = vmatpush1.bf16.msra.mxu0 %v979
  %999 = vmatprep.subr.bf16.mxu0 0
  %1000 = vmatpush1.bf16.msra.mxu0 %v980
  %1001 = vmatprep.subr.bf16.mxu0 0
  %1002 = vmatpush1.bf16.msra.mxu0 %v981
  %1003 = vmatprep.subr.bf16.mxu0 0
  %1004 = vmatpush1.bf16.msra.mxu0 %v982
  %1005 = vmatprep.subr.bf16.mxu0 0
  %1006 = vmatpush1.bf16.msra.mxu0 %v983
  %1007 = vmatprep.subr.bf16.mxu0 0
  %1008 = vmatpush1.bf16.msra.mxu0 %v984
  %1009 = vmatprep.subr.bf16.mxu0 0
  %1010 = vmatpush1.bf16.msra.mxu0 0
  %1011 = vmatprep.subr.bf16.mxu0 0
  %1012 = vmatpush1.bf16.msra.mxu0 0
  %1013 = vmatprep.subr.bf16.mxu0 0
  %1014 = vmatpush1.bf16.msra.mxu0 0
  %1015 = vmatprep.subr.bf16.mxu0 0
  %1016 = vmatpush1.bf16.msra.mxu0 0
  %1017 = vmatprep.subr.bf16.mxu0 0
  %1018 = vmatpush1.bf16.msra.mxu0 0
  %1019 = vmatprep.subr.bf16.mxu0 0
  %1020 = vmatpush1.bf16.msra.mxu0 0
  %1021 = vmatprep.subr.bf16.mxu0 0
  %1022 = vmatpush1.bf16.msra.mxu0 0
  %1023 = vmatprep.subr.bf16.mxu0 0
  %1024 = vmatpush1.bf16.msra.mxu0 0
  %1025 = vmatprep.mubr.bf16.mxu0 0
  %1026 = vmatmul.mubr.bf16.gmra.mrb[0].mxu0 %v906
  %v1027 = vpop.f32.mrb[0].mxu0
  %v1028 = vadd.f32 %v943, %v1027
  %v1029 = vpop.f32.mrb[0].mxu0
  %v1030 = vpop.f32.mrb[0].mxu0
  %v1031 = vadd.f32 %v943, %v1030
  %v1032 = vpop.f32.mrb[0].mxu0
  %1033 = vmatprep.mubr.bf16.mxu0 0
  %1034 = vmatmul.mubr.bf16.gmra.mrb[0].mxu0 %v907
  %v1035 = vpop.f32.mrb[0].mxu0
  %v1036 = vadd.f32 %v943, %v1035
  %v1037 = vpop.f32.mrb[0].mxu0
  %v1038 = vpop.f32.mrb[0].mxu0
  %v1039 = vadd.f32 %v943, %v1038
  %v1040 = vpop.f32.mrb[0].mxu0
  %1041 = vmatprep.mubr.bf16.mxu0 0
  %1042 = vmatmul.mubr.bf16.gmra.mrb[0].mxu0 %v908
  %v1043 = vpop.f32.mrb[0].mxu0
  %v1044 = vadd.f32 %v943, %v1043
  %v1045 = vpop.f32.mrb[0].mxu0
  %v1046 = vpop.f32.mrb[0].mxu0
  %v1047 = vadd.f32 %v943, %v1046
  %v1048 = vpop.f32.mrb[0].mxu0
  %1049 = vmatprep.mubr.bf16.mxu0 0
  %1050 = vmatmul.mubr.bf16.gmra.mrb[0].mxu0 %v909
  %v1051 = vpop.f32.mrb[0].mxu0
  %v1052 = vadd.f32 %v943, %v1051
  %v1053 = vpop.f32.mrb[0].mxu0
  %v1054 = vpop.f32.mrb[0].mxu0
  %v1055 = vadd.f32 %v943, %v1054
  %v1056 = vpop.f32.mrb[0].mxu0
  %1057 = vmatprep.mubr.bf16.mxu0 0
  %1058 = vmatmul.mubr.bf16.gmra.mrb[0].mxu0 %v910
  %v1059 = vpop.f32.mrb[0].mxu0
  %v1060 = vadd.f32 %v943, %v1059
  %v1061 = vpop.f32.mrb[0].mxu0
  %v1062 = vpop.f32.mrb[0].mxu0
  %v1063 = vadd.f32 %v943, %v1062
  %v1064 = vpop.f32.mrb[0].mxu0
  %1065 = vmatprep.mubr.bf16.mxu0 0
  %1066 = vmatmul.mubr.bf16.gmra.mrb[0].mxu0 %v911
  %v1067 = vpop.f32.mrb[0].mxu0
  %v1068 = vadd.f32 %v943, %v1067
  %v1069 = vpop.f32.mrb[0].mxu0
  %v1070 = vpop.f32.mrb[0].mxu0
  %v1071 = vadd.f32 %v943, %v1070
  %v1072 = vpop.f32.mrb[0].mxu0
  %1073 = vmatprep.mubr.bf16.mxu0 0
  %1074 = vmatmul.mubr.bf16.gmra.mrb[0].mxu0 %v912
  %v1075 = vpop.f32.mrb[0].mxu0
  %v1076 = vadd.f32 %v943, %v1075
  %v1077 = vpop.f32.mrb[0].mxu0
  %v1078 = vpop.f32.mrb[0].mxu0
  %v1079 = vadd.f32 %v943, %v1078
  %v1080 = vpop.f32.mrb[0].mxu0
  %1081 = vmatprep.mubr.bf16.mxu0 0
  %1082 = vmatmul.mubr.bf16.gmra.mrb[0].mxu0 %v913
  %v1083 = vpop.f32.mrb[0].mxu0
  %v1084 = vadd.f32 %v943, %v1083
  %v1085 = vpop.f32.mrb[0].mxu0
  %v1086 = vpop.f32.mrb[0].mxu0
  %v1087 = vadd.f32 %v943, %v1086
  %v1088 = vpop.f32.mrb[0].mxu0
  %1089 = vmatprep.mubr.bf16.mxu0 0
  %1090 = vmatmul.mubr.bf16.gmra.mrb[0].mxu0 %v914
  %v1091 = vpop.f32.mrb[0].mxu0
  %v1092 = vadd.f32 %v943, %v1091
  %v1093 = vpop.f32.mrb[0].mxu0
  %v1094 = vpop.f32.mrb[0].mxu0
  %v1095 = vadd.f32 %v943, %v1094
  %v1096 = vpop.f32.mrb[0].mxu0
  %1097 = vmatprep.mubr.bf16.mxu0 0
  %1098 = vmatmul.mubr.bf16.gmra.mrb[0].mxu0 %v915
  %v1099 = vpop.f32.mrb[0].mxu0
  %v1100 = vadd.f32 %v943, %v1099
  %v1101 = vpop.f32.mrb[0].mxu0
  %v1102 = vpop.f32.mrb[0].mxu0
  %v1103 = vadd.f32 %v943, %v1102
  %v1104 = vpop.f32.mrb[0].mxu0
  %1105 = vmatprep.mubr.bf16.mxu0 0
  %1106 = vmatmul.mubr.bf16.gmra.mrb[0].mxu0 %v916
  %v1107 = vpop.f32.mrb[0].mxu0
  %v1108 = vadd.f32 %v943, %v1107
  %v1109 = vpop.f32.mrb[0].mxu0
  %v1110 = vpop.f32.mrb[0].mxu0
  %v1111 = vadd.f32 %v943, %v1110
  %v1112 = vpop.f32.mrb[0].mxu0
  %1113 = vmatprep.mubr.bf16.mxu0 0
  %1114 = vmatmul.mubr.bf16.gmra.mrb[0].mxu0 %v917
  %v1115 = vpop.f32.mrb[0].mxu0
  %v1116 = vadd.f32 %v943, %v1115
  %v1117 = vpop.f32.mrb[0].mxu0
  %v1118 = vpop.f32.mrb[0].mxu0
  %v1119 = vadd.f32 %v943, %v1118
  %v1120 = vpop.f32.mrb[0].mxu0
  %1121 = vmatprep.mubr.bf16.mxu0 0
  %1122 = vmatmul.mubr.bf16.gmra.mrb[0].mxu0 %v918
  %v1123 = vpop.f32.mrb[0].mxu0
  %v1124 = vadd.f32 %v943, %v1123
  %v1125 = vpop.f32.mrb[0].mxu0
  %v1126 = vpop.f32.mrb[0].mxu0
  %v1127 = vadd.f32 %v943, %v1126
  %v1128 = vpop.f32.mrb[0].mxu0
  %1129 = vmatprep.mubr.bf16.mxu0 0
  %1130 = vmatmul.mubr.bf16.gmra.mrb[0].mxu0 %v919
  %v1131 = vpop.f32.mrb[0].mxu0
  %v1132 = vadd.f32 %v943, %v1131
  %v1133 = vpop.f32.mrb[0].mxu0
  %v1134 = vpop.f32.mrb[0].mxu0
  %v1135 = vadd.f32 %v943, %v1134
  %v1136 = vpop.f32.mrb[0].mxu0
  %1137 = vmatprep.mubr.bf16.mxu0 0
  %1138 = vmatmul.mubr.bf16.gmra.mrb[0].mxu0 %v920
  %v1139 = vpop.f32.mrb[0].mxu0
  %v1140 = vadd.f32 %v943, %v1139
  %v1141 = vpop.f32.mrb[0].mxu0
  %v1142 = vpop.f32.mrb[0].mxu0
  %v1143 = vadd.f32 %v943, %v1142
  %v1144 = vpop.f32.mrb[0].mxu0
  %1145 = vmatprep.mubr.bf16.mxu0 0
  %1146 = vmatmul.mubr.bf16.gmra.mrb[0].mxu0 %v921
  %v1147 = vpop.f32.mrb[0].mxu0
  %v1148 = vadd.f32 %v943, %v1147
  %v1149 = vpop.f32.mrb[0].mxu0
  %v1150 = vpop.f32.mrb[0].mxu0
  %v1151 = vadd.f32 %v943, %v1150
  %v1152 = vpop.f32.mrb[0].mxu0
  %1153 = vdwg.mxu0
  %1154 = vst [vmem:[%s9] sm:$0xff] %v1028
  %1155 = vst [vmem:[%s9 + $0x8] sm:$0xff] %v1031
  %1156 = vst [vmem:[%s9 + $0x10] sm:$0xff] %v1036
  %1157 = vst [vmem:[%s9 + $0x18] sm:$0xff] %v1039
  %1158 = vst [vmem:[%s9 + $0x20] sm:$0xff] %v1044
  %1159 = vst [vmem:[%s9 + $0x28] sm:$0xff] %v1047
  %1160 = vst [vmem:[%s9 + $0x30] sm:$0xff] %v1052
  %1161 = vst [vmem:[%s9 + $0x38] sm:$0xff] %v1055
  %1162 = vst [vmem:[%s9 + $0x40] sm:$0xff] %v1060
  %1163 = vst [vmem:[%s9 + $0x48] sm:$0xff] %v1063
  %1164 = vst [vmem:[%s9 + $0x50] sm:$0xff] %v1068
  %1165 = vst [vmem:[%s9 + $0x58] sm:$0xff] %v1071
  %1166 = vst [vmem:[%s9 + $0x60] sm:$0xff] %v1076
  %1167 = vst [vmem:[%s9 + $0x68] sm:$0xff] %v1079
  %1168 = vst [vmem:[%s9 + $0x70] sm:$0xff] %v1084
  %1169 = vst [vmem:[%s9 + $0x78] sm:$0xff] %v1087
  %1170 = vst [vmem:[%s9 + $0x80] sm:$0xff] %v1092
  %1171 = vst [vmem:[%s9 + $0x88] sm:$0xff] %v1095
  %1172 = vst [vmem:[%s9 + $0x90] sm:$0xff] %v1100
  %1173 = vst [vmem:[%s9 + $0x98] sm:$0xff] %v1103
  %1174 = vst [vmem:[%s9 + $0xa0] sm:$0xff] %v1108
  %1175 = vst [vmem:[%s9 + $0xa8] sm:$0xff] %v1111
  %1176 = vst [vmem:[%s9 + $0xb0] sm:$0xff] %v1116
  %1177 = vst [vmem:[%s9 + $0xb8] sm:$0xff] %v1119
  %1178 = vst [vmem:[%s9 + $0xc0] sm:$0xff] %v1124
  %1179 = vst [vmem:[%s9 + $0xc8] sm:$0xff] %v1127
  %1180 = vst [vmem:[%s9 + $0xd0] sm:$0xff] %v1132
  %1181 = vst [vmem:[%s9 + $0xd8] sm:$0xff] %v1135
  %1182 = vst [vmem:[%s9 + $0xe0] sm:$0xff] %v1140
  %1183 = vst [vmem:[%s9 + $0xe8] sm:$0xff] %v1143
  %1184 = vst [vmem:[%s9 + $0xf0] sm:$0xff] %v1148
  %1185 = vst [vmem:[%s9 + $0xf8] sm:$0xff] %v1151
  // Predicated region
  $region38: #{_lambda_.1} parent=0 // pred_check
    _
  $region39: #{_lambda_.1} parent=0 // pred_check_branch
    %1187 = sbr.rel (0) target = $region41
  $region40: #{_lambda_.1} parent=0 // pred_region
    _
  $region41: #{_lambda_.1} parent=0 // pred_fallthru
    _
  // Predicated region
  $region42: #{_lambda_.1} parent=0 // pred_check
    _
  $region43: #{_lambda_.1} parent=0 // pred_check_branch
    %1189 = sbr.rel (0) target = $region45
  $region44: #{_lambda_.1} parent=0 // pred_region
    _
  $region45: #{_lambda_.1} parent=0 // pred_fallthru
    _

</llo_original>
